<compile_context>
chip_gen: v7x
topology: tpu7x:2x2x1
jax: 0.10.0
libtpu: 0.0.40
codegen_flags: <defaults>
</compile_context>

<pallas_src>
import functools

import jax
import jax.numpy as jnp
from jax import lax
from jax.experimental import pallas as pl
from jax.experimental.pallas import tpu as pltpu

T = 10          # fixed in the reference module (self.T = 10)
NUM_OPS = 4     # stand-in candidate op count
LN_EPS = 1e-5   # PyTorch nn.LayerNorm default eps


# ----------------------------------------------------------------------------
# One fused kernel: all cells + fusion_layer, gridded over batch.
# ----------------------------------------------------------------------------
def _fused_forward_kernel(num_scale, num_cells,
                          aw_ref, cop_ref, feats_ref, w_ref, b_ref,
                          g_ref, bln_ref, out_ref, stages_out_ref):
    # aw_ref        : SMEM [2*num_cells, S_max]  padded softmax(alpha) rows
    # cop_ref       : SMEM [num_cells, 3]        folded softmax(beta) coefficients
    # feats_ref     : VMEM [num_scale, T, D]     input stages for this sample
    # w_ref         : VMEM [num_cells*D, D]      fusion Linear weight
    # b_ref         : VMEM [1, D]                fusion Linear bias
    # g_ref, bln_ref: VMEM [T, D]                LayerNorm weight / bias
    # out_ref       : VMEM [T, D]                fused output for this sample
    # stages_out_ref: VMEM [num_cells, T, D]     the num_cells new stages
    Tt, D = out_ref.shape

    # Stages stay resident in vregs/VMEM; no HBM traffic between cells.
    stages = [feats_ref[s] for s in range(num_scale)]

    for i in range(num_cells):
        S = num_scale + i
        x = aw_ref[2 * i, 0] * stages[0]
        y = aw_ref[2 * i + 1, 0] * stages[0]
        for s in range(1, S):                       # S is small & static; unrolled
            x = x + aw_ref[2 * i, s] * stages[s]
            y = y + aw_ref[2 * i + 1, s] * stages[s]
        # Folded candidate-op mix:
        #   bw0*(x+y) + bw1*(x*y) + bw2*max(x,y) + bw3*0.5*(x+y)
        # = c_sum*(x+y) + c_mul*(x*y) + c_max*max(x,y)
        z = (cop_ref[i, 0] * (x + y)
             + cop_ref[i, 1] * (x * y)
             + cop_ref[i, 2] * jnp.maximum(x, y))
        stages.append(z)
        stages_out_ref[i] = z.astype(stages_out_ref.dtype)

    # fusion_layer: Linear(D*num_cells -> D) as a sum of per-cell [D, D] blocks
    # (equivalent to concat along D followed by one matmul, without the concat).
    h = jnp.zeros((Tt, D), jnp.float32)
    for c in range(num_cells):
        h = h + jnp.dot(stages[num_scale + c],
                        w_ref[pl.ds(c * D, D), :],
                        preferred_element_type=jnp.float32)
    h = h + b_ref[...]

    # LayerNorm over the full [T, D] slab (normalized_shape=[T, D]) + ReLU.
    n = jnp.float32(Tt * D)
    mu = jnp.sum(h) / n
    var = jnp.sum(h * h) / n - mu * mu
    hn = (h - mu) * lax.rsqrt(var + LN_EPS)
    out_ref[...] = jnp.maximum(hn * g_ref[...] + bln_ref[...], 0.0).astype(out_ref.dtype)


# ----------------------------------------------------------------------------
# Host-side folding of the architecture parameters into SMEM scalar tables.
# ----------------------------------------------------------------------------
def _fold_arch_params(alphas, betas):
    num_cells = len(alphas)
    s_max = max(a.shape[1] for a in alphas)
    aw = jnp.zeros((2 * num_cells, s_max), jnp.float32)
    for i, a in enumerate(alphas):
        w = jax.nn.softmax(a.astype(jnp.float32), axis=-1)        # [2, S_i]
        aw = aw.at[2 * i:2 * i + 2, :a.shape[1]].set(w)
    cop_rows = []
    for b in betas:
        bw = jax.nn.softmax(b.astype(jnp.float32), axis=-1)       # [NUM_OPS]
        cop_rows.append(jnp.stack([bw[0] + 0.5 * bw[3], bw[1], bw[2]]))
    cop = jnp.stack(cop_rows)                                     # [num_cells, 3]
    return aw, cop


# ----------------------------------------------------------------------------
# Module forward (single pallas_call)
# ----------------------------------------------------------------------------
def searchable_single_modal_fusion_forward(feats, params):
    num_cells = len(params["alphas"])
    num_scale = len(feats)
    B, Tt, D = feats[0].shape
    Din = D * num_cells

    # Inputs are stacked exactly once (cells never re-stack).
    feats_stacked = jnp.stack(feats, axis=0)          # [num_scale, B, T, D]
    aw, cop = _fold_arch_params(params["alphas"], params["betas"])

    kernel = functools.partial(_fused_forward_kernel, num_scale, num_cells)

    cell_flops = sum(4 * (num_scale + i) + 8 for i in range(num_cells)) * Tt * D
    flops_per_sample = cell_flops + 2 * Tt * Din * D + 8 * Tt * D
    cost = pl.CostEstimate(
        flops=B * flops_per_sample,
        transcendentals=B,
        bytes_accessed=4 * (num_scale * B * Tt * D + Din * D + D + 2 * Tt * D
                            + B * Tt * D + num_cells * B * Tt * D))

    out, stages_out = pl.pallas_call(
        kernel,
        out_shape=(
            jax.ShapeDtypeStruct((B, Tt, D), jnp.float32),
            jax.ShapeDtypeStruct((num_cells, B, Tt, D), jnp.float32),
        ),
        grid=(B,),
        in_specs=[
            pl.BlockSpec(memory_space=pltpu.MemorySpace.SMEM),            # aw
            pl.BlockSpec(memory_space=pltpu.MemorySpace.SMEM),            # cop
            pl.BlockSpec((num_scale, None, Tt, D), lambda b: (0, b, 0, 0)),
            pl.BlockSpec((Din, D), lambda b: (0, 0)),
            pl.BlockSpec((1, D), lambda b: (0, 0)),
            pl.BlockSpec((Tt, D), lambda b: (0, 0)),
            pl.BlockSpec((Tt, D), lambda b: (0, 0)),
        ],
        out_specs=(
            pl.BlockSpec((None, Tt, D), lambda b: (b, 0, 0)),
            pl.BlockSpec((num_cells, None, Tt, D), lambda b: (0, b, 0, 0)),
        ),
        compiler_params=pltpu.CompilerParams(
            dimension_semantics=("parallel",),
            vmem_limit_bytes=32 * 1024 * 1024),
        cost_estimate=cost,
    )(aw, cop, feats_stacked, params["fc_w"], params["fc_b"],
      params["ln_gamma"], params["ln_beta"])

    return out, [stages_out[i] for i in range(num_cells)]


# ----------------------------------------------------------------------------
# Pure-JAX reference (mirrors the PyTorch forward with the stand-in op set)
# ----------------------------------------------------------------------------
def _reference_forward(feats, params):
    num_cells = len(params["alphas"])
    stage_list = list(feats)
    for i in range(num_cells):
        stages = jnp.stack(stage_list, axis=-1)                    # [B, T, D, S]
        w = jax.nn.softmax(params["alphas"][i], axis=-1)
        x = stages @ w[0]
        y = stages @ w[1]
        bw = jax.nn.softmax(params["betas"][i], axis=-1)
        z = (bw[0] * (x + y) + bw[1] * (x * y)
             + bw[2] * jnp.maximum(x, y) + bw[3] * 0.5 * (x + y))
        stage_list.append(z)
    zcat = jnp.concatenate(stage_list[-num_cells:], axis=-1)       # [B, T, D*C]
    h = zcat @ params["fc_w"] + params["fc_b"]
    mu = jnp.mean(h, axis=(1, 2), keepdims=True)
    var = jnp.mean(jnp.square(h - mu), axis=(1, 2), keepdims=True)
    hn = (h - mu) / jnp.sqrt(var + LN_EPS)
    out = jnp.maximum(hn * params["ln_gamma"] + params["ln_beta"], 0.0)
    return out, stage_list[-num_cells:]


if __name__ == "__main__":
    key = jax.random.PRNGKey(0)
    B, D = 2, 32
    num_scale, num_cells = 3, 2            # args.num_scale, args.num_cells
    Din = D * num_cells

    keys = jax.random.split(key, 16)

    # input features: list of num_scale tensors [B, T, D]
    feats = [jax.random.normal(keys[i], (B, T, D), dtype=jnp.float32)
             for i in range(num_scale)]

    # architecture params: alpha_i is [2, num_scale + i], beta_i is [NUM_OPS]
    alphas = [0.001 * jax.random.normal(keys[4 + i], (2, num_scale + i),
                                        dtype=jnp.float32)
              for i in range(num_cells)]
    betas = [0.001 * jax.random.normal(keys[8 + i], (NUM_OPS,),
                                       dtype=jnp.float32)
             for i in range(num_cells)]

    # fusion_layer params: Linear(D*num_cells, D) + LayerNorm([T, D])
    fc_w = (jax.random.normal(keys[12], (Din, D), dtype=jnp.float32)
            / jnp.sqrt(jnp.float32(Din)))
    fc_b = 0.01 * jax.random.normal(keys[13], (1, D), dtype=jnp.float32)
    ln_gamma = jnp.ones((T, D), dtype=jnp.float32)
    ln_beta = jnp.zeros((T, D), dtype=jnp.float32)

    params = {
        "alphas": alphas,
        "betas": betas,
        "fc_w": fc_w,
        "fc_b": fc_b,
        "ln_gamma": ln_gamma,
        "ln_beta": ln_beta,
    }

    out, last_stages = searchable_single_modal_fusion_forward(feats, params)
    jax.block_until_ready(out)

    ref_out, ref_stages = _reference_forward(feats, params)
    assert out.shape == (B, T, D)
    assert len(last_stages) == num_cells
    assert jnp.allclose(out, ref_out, atol=1e-4, rtol=1e-4)
    for got, want in zip(last_stages, ref_stages):
        assert got.shape == (B, T, D)
        assert jnp.allclose(got, want, atol=1e-4, rtol=1e-4)
    print("KERNEL_OK")
</pallas_src>

<mosaic_0001>
module attributes {stable_mosaic.version = 11 : i64} {
  func.func @_fused_forward_kernel(%arg0: i32, %arg1: memref<4x4xf32, #tpu.memory_space<smem>>, %arg2: memref<2x3xf32, #tpu.memory_space<smem>>, %arg3: memref<3x1x10x32xf32, #tpu.memory_space<vmem>>, %arg4: memref<64x32xf32, #tpu.memory_space<vmem>>, %arg5: memref<1x32xf32, #tpu.memory_space<vmem>>, %arg6: memref<10x32xf32, #tpu.memory_space<vmem>>, %arg7: memref<10x32xf32, #tpu.memory_space<vmem>>, %arg8: memref<1x10x32xf32, #tpu.memory_space<vmem>>, %arg9: memref<2x1x10x32xf32, #tpu.memory_space<vmem>>) attributes {dimension_semantics = [#tpu.dimension_semantics<parallel>], iteration_bounds = array<i64: 2>, scalar_prefetch = 0 : i64, scratch_operands = 0 : i64, tpu.core_type = #tpu.core_type<tc>, window_params = [{transform_indices = @transform_0, window_bounds = array<i64: 4, 4>}, {transform_indices = @transform_1, window_bounds = array<i64: 2, 3>}, {transform_indices = @transform_2, window_bounds = array<i64: 3, 1, 10, 32>}, {pipeline_mode = #tpu.pipeline_mode<synchronous>, transform_indices = @transform_3, window_bounds = array<i64: 64, 32>}, {pipeline_mode = #tpu.pipeline_mode<synchronous>, transform_indices = @transform_4, window_bounds = array<i64: 1, 32>}, {pipeline_mode = #tpu.pipeline_mode<synchronous>, transform_indices = @transform_5, window_bounds = array<i64: 10, 32>}, {pipeline_mode = #tpu.pipeline_mode<synchronous>, transform_indices = @transform_6, window_bounds = array<i64: 10, 32>}, {transform_indices = @transform_7, window_bounds = array<i64: 1, 10, 32>}, {transform_indices = @transform_8, window_bounds = array<i64: 2, 1, 10, 32>}]} {
    %c0 = arith.constant 0 : index
    %c0_0 = arith.constant 0 : index
    %c0_1 = arith.constant 0 : index
    %c0_2 = arith.constant 0 : index
    %0 = vector.load %arg3[%c0, %c0_0, %c0_1, %c0_2] : memref<3x1x10x32xf32, #tpu.memory_space<vmem>>, vector<1x1x10x32xf32>
    %1 = vector.shape_cast %0 : vector<1x1x10x32xf32> to vector<10x32xf32>
    %c1 = arith.constant 1 : index
    %c0_3 = arith.constant 0 : index
    %c0_4 = arith.constant 0 : index
    %c0_5 = arith.constant 0 : index
    %2 = vector.load %arg3[%c1, %c0_3, %c0_4, %c0_5] : memref<3x1x10x32xf32, #tpu.memory_space<vmem>>, vector<1x1x10x32xf32>
    %3 = vector.shape_cast %2 : vector<1x1x10x32xf32> to vector<10x32xf32>
    %c2 = arith.constant 2 : index
    %c0_6 = arith.constant 0 : index
    %c0_7 = arith.constant 0 : index
    %c0_8 = arith.constant 0 : index
    %4 = vector.load %arg3[%c2, %c0_6, %c0_7, %c0_8] : memref<3x1x10x32xf32, #tpu.memory_space<vmem>>, vector<1x1x10x32xf32>
    %5 = vector.shape_cast %4 : vector<1x1x10x32xf32> to vector<10x32xf32>
    %c0_9 = arith.constant 0 : index
    %c0_10 = arith.constant 0 : index
    %6 = memref.load %arg1[%c0_9, %c0_10] : memref<4x4xf32, #tpu.memory_space<smem>>
    %7 = vector.broadcast %6 : f32 to vector<10x32xf32>
    %8 = arith.mulf %7, %1 : vector<10x32xf32>
    %c1_11 = arith.constant 1 : index
    %c0_12 = arith.constant 0 : index
    %9 = memref.load %arg1[%c1_11, %c0_12] : memref<4x4xf32, #tpu.memory_space<smem>>
    %10 = vector.broadcast %9 : f32 to vector<10x32xf32>
    %11 = arith.mulf %10, %1 : vector<10x32xf32>
    %c0_13 = arith.constant 0 : index
    %c1_14 = arith.constant 1 : index
    %12 = memref.load %arg1[%c0_13, %c1_14] : memref<4x4xf32, #tpu.memory_space<smem>>
    %13 = vector.broadcast %12 : f32 to vector<10x32xf32>
    %14 = arith.mulf %13, %3 : vector<10x32xf32>
    %15 = arith.addf %8, %14 : vector<10x32xf32>
    %c1_15 = arith.constant 1 : index
    %c1_16 = arith.constant 1 : index
    %16 = memref.load %arg1[%c1_15, %c1_16] : memref<4x4xf32, #tpu.memory_space<smem>>
    %17 = vector.broadcast %16 : f32 to vector<10x32xf32>
    %18 = arith.mulf %17, %3 : vector<10x32xf32>
    %19 = arith.addf %11, %18 : vector<10x32xf32>
    %c0_17 = arith.constant 0 : index
    %c2_18 = arith.constant 2 : index
    %20 = memref.load %arg1[%c0_17, %c2_18] : memref<4x4xf32, #tpu.memory_space<smem>>
    %21 = vector.broadcast %20 : f32 to vector<10x32xf32>
    %22 = arith.mulf %21, %5 : vector<10x32xf32>
    %23 = arith.addf %15, %22 : vector<10x32xf32>
    %c1_19 = arith.constant 1 : index
    %c2_20 = arith.constant 2 : index
    %24 = memref.load %arg1[%c1_19, %c2_20] : memref<4x4xf32, #tpu.memory_space<smem>>
    %25 = vector.broadcast %24 : f32 to vector<10x32xf32>
    %26 = arith.mulf %25, %5 : vector<10x32xf32>
    %27 = arith.addf %19, %26 : vector<10x32xf32>
    %c0_21 = arith.constant 0 : index
    %c0_22 = arith.constant 0 : index
    %28 = memref.load %arg2[%c0_21, %c0_22] : memref<2x3xf32, #tpu.memory_space<smem>>
    %29 = arith.addf %23, %27 : vector<10x32xf32>
    %30 = vector.broadcast %28 : f32 to vector<10x32xf32>
    %31 = arith.mulf %30, %29 : vector<10x32xf32>
    %c0_23 = arith.constant 0 : index
    %c1_24 = arith.constant 1 : index
    %32 = memref.load %arg2[%c0_23, %c1_24] : memref<2x3xf32, #tpu.memory_space<smem>>
    %33 = arith.mulf %23, %27 : vector<10x32xf32>
    %34 = vector.broadcast %32 : f32 to vector<10x32xf32>
    %35 = arith.mulf %34, %33 : vector<10x32xf32>
    %36 = arith.addf %31, %35 : vector<10x32xf32>
    %c0_25 = arith.constant 0 : index
    %c2_26 = arith.constant 2 : index
    %37 = memref.load %arg2[%c0_25, %c2_26] : memref<2x3xf32, #tpu.memory_space<smem>>
    %38 = arith.maximumf %23, %27 : vector<10x32xf32>
    %39 = vector.broadcast %37 : f32 to vector<10x32xf32>
    %40 = arith.mulf %39, %38 : vector<10x32xf32>
    %41 = arith.addf %36, %40 : vector<10x32xf32>
    %c0_27 = arith.constant 0 : index
    %c0_28 = arith.constant 0 : index
    %c0_29 = arith.constant 0 : index
    %c0_30 = arith.constant 0 : index
    %42 = vector.load %arg9[%c0_27, %c0_28, %c0_29, %c0_30] : memref<2x1x10x32xf32, #tpu.memory_space<vmem>>, vector<1x1x10x32xf32>
    %43 = vector.shape_cast %42 : vector<1x1x10x32xf32> to vector<10x32xf32>
    %44 = vector.shape_cast %41 : vector<10x32xf32> to vector<1x1x10x32xf32>
    tpu.vector_store %arg9[%c0_27, %c0_28, %c0_29, %c0_30], %44 {strides = array<i32>} : memref<2x1x10x32xf32, #tpu.memory_space<vmem>>, vector<1x1x10x32xf32>,
    %c2_31 = arith.constant 2 : index
    %c0_32 = arith.constant 0 : index
    %45 = memref.load %arg1[%c2_31, %c0_32] : memref<4x4xf32, #tpu.memory_space<smem>>
    %46 = vector.broadcast %45 : f32 to vector<10x32xf32>
    %47 = arith.mulf %46, %1 : vector<10x32xf32>
    %c3 = arith.constant 3 : index
    %c0_33 = arith.constant 0 : index
    %48 = memref.load %arg1[%c3, %c0_33] : memref<4x4xf32, #tpu.memory_space<smem>>
    %49 = vector.broadcast %48 : f32 to vector<10x32xf32>
    %50 = arith.mulf %49, %1 : vector<10x32xf32>
    %c2_34 = arith.constant 2 : index
    %c1_35 = arith.constant 1 : index
    %51 = memref.load %arg1[%c2_34, %c1_35] : memref<4x4xf32, #tpu.memory_space<smem>>
    %52 = vector.broadcast %51 : f32 to vector<10x32xf32>
    %53 = arith.mulf %52, %3 : vector<10x32xf32>
    %54 = arith.addf %47, %53 : vector<10x32xf32>
    %c3_36 = arith.constant 3 : index
    %c1_37 = arith.constant 1 : index
    %55 = memref.load %arg1[%c3_36, %c1_37] : memref<4x4xf32, #tpu.memory_space<smem>>
    %56 = vector.broadcast %55 : f32 to vector<10x32xf32>
    %57 = arith.mulf %56, %3 : vector<10x32xf32>
    %58 = arith.addf %50, %57 : vector<10x32xf32>
    %c2_38 = arith.constant 2 : index
    %c2_39 = arith.constant 2 : index
    %59 = memref.load %arg1[%c2_38, %c2_39] : memref<4x4xf32, #tpu.memory_space<smem>>
    %60 = vector.broadcast %59 : f32 to vector<10x32xf32>
    %61 = arith.mulf %60, %5 : vector<10x32xf32>
    %62 = arith.addf %54, %61 : vector<10x32xf32>
    %c3_40 = arith.constant 3 : index
    %c2_41 = arith.constant 2 : index
    %63 = memref.load %arg1[%c3_40, %c2_41] : memref<4x4xf32, #tpu.memory_space<smem>>
    %64 = vector.broadcast %63 : f32 to vector<10x32xf32>
    %65 = arith.mulf %64, %5 : vector<10x32xf32>
    %66 = arith.addf %58, %65 : vector<10x32xf32>
    %c2_42 = arith.constant 2 : index
    %c3_43 = arith.constant 3 : index
    %67 = memref.load %arg1[%c2_42, %c3_43] : memref<4x4xf32, #tpu.memory_space<smem>>
    %68 = vector.broadcast %67 : f32 to vector<10x32xf32>
    %69 = arith.mulf %68, %41 : vector<10x32xf32>
    %70 = arith.addf %62, %69 : vector<10x32xf32>
    %c3_44 = arith.constant 3 : index
    %c3_45 = arith.constant 3 : index
    %71 = memref.load %arg1[%c3_44, %c3_45] : memref<4x4xf32, #tpu.memory_space<smem>>
    %72 = vector.broadcast %71 : f32 to vector<10x32xf32>
    %73 = arith.mulf %72, %41 : vector<10x32xf32>
    %74 = arith.addf %66, %73 : vector<10x32xf32>
    %c1_46 = arith.constant 1 : index
    %c0_47 = arith.constant 0 : index
    %75 = memref.load %arg2[%c1_46, %c0_47] : memref<2x3xf32, #tpu.memory_space<smem>>
    %76 = arith.addf %70, %74 : vector<10x32xf32>
    %77 = vector.broadcast %75 : f32 to vector<10x32xf32>
    %78 = arith.mulf %77, %76 : vector<10x32xf32>
    %c1_48 = arith.constant 1 : index
    %c1_49 = arith.constant 1 : index
    %79 = memref.load %arg2[%c1_48, %c1_49] : memref<2x3xf32, #tpu.memory_space<smem>>
    %80 = arith.mulf %70, %74 : vector<10x32xf32>
    %81 = vector.broadcast %79 : f32 to vector<10x32xf32>
    %82 = arith.mulf %81, %80 : vector<10x32xf32>
    %83 = arith.addf %78, %82 : vector<10x32xf32>
    %c1_50 = arith.constant 1 : index
    %c2_51 = arith.constant 2 : index
    %84 = memref.load %arg2[%c1_50, %c2_51] : memref<2x3xf32, #tpu.memory_space<smem>>
    %85 = arith.maximumf %70, %74 : vector<10x32xf32>
    %86 = vector.broadcast %84 : f32 to vector<10x32xf32>
    %87 = arith.mulf %86, %85 : vector<10x32xf32>
    %88 = arith.addf %83, %87 : vector<10x32xf32>
    %c1_52 = arith.constant 1 : index
    %c0_53 = arith.constant 0 : index
    %c0_54 = arith.constant 0 : index
    %c0_55 = arith.constant 0 : index
    %89 = vector.load %arg9[%c1_52, %c0_53, %c0_54, %c0_55] : memref<2x1x10x32xf32, #tpu.memory_space<vmem>>, vector<1x1x10x32xf32>
    %90 = vector.shape_cast %89 : vector<1x1x10x32xf32> to vector<10x32xf32>
    %91 = vector.shape_cast %88 : vector<10x32xf32> to vector<1x1x10x32xf32>
    tpu.vector_store %arg9[%c1_52, %c0_53, %c0_54, %c0_55], %91 {strides = array<i32>} : memref<2x1x10x32xf32, #tpu.memory_space<vmem>>, vector<1x1x10x32xf32>,
    %cst = arith.constant 0.000000e+00 : f32
    %92 = vector.broadcast %cst : f32 to vector<10x32xf32>
    %c0_56 = arith.constant 0 : index
    %c0_57 = arith.constant 0 : index
    %93 = vector.load %arg4[%c0_56, %c0_57] : memref<64x32xf32, #tpu.memory_space<vmem>>, vector<32x32xf32>
    %cst_58 = arith.constant dense<0.000000e+00> : vector<10x32xf32>
    %94 = tpu.matmul %41, %93, %cst_58 {dimension_numbers = #tpu.dot_dimension_numbers<[1], [0], [0], [1], [0, 0, 1, 1], [], []>} : vector<10x32xf32>, vector<32x32xf32>, vector<10x32xf32> -> vector<10x32xf32>
    %95 = arith.addf %92, %94 : vector<10x32xf32>
    %c32 = arith.constant 32 : index
    %c0_59 = arith.constant 0 : index
    %96 = vector.load %arg4[%c32, %c0_59] : memref<64x32xf32, #tpu.memory_space<vmem>>, vector<32x32xf32>
    %cst_60 = arith.constant dense<0.000000e+00> : vector<10x32xf32>
    %97 = tpu.matmul %88, %96, %cst_60 {dimension_numbers = #tpu.dot_dimension_numbers<[1], [0], [0], [1], [0, 0, 1, 1], [], []>} : vector<10x32xf32>, vector<32x32xf32>, vector<10x32xf32> -> vector<10x32xf32>
    %98 = arith.addf %95, %97 : vector<10x32xf32>
    %c0_61 = arith.constant 0 : index
    %c0_62 = arith.constant 0 : index
    %99 = vector.load %arg5[%c0_61, %c0_62] : memref<1x32xf32, #tpu.memory_space<vmem>>, vector<1x32xf32>
    %100 = vector.broadcast %99 : vector<1x32xf32> to vector<10x32xf32>
    %101 = arith.addf %98, %100 : vector<10x32xf32>
    %102 = vector.shape_cast %101 : vector<10x32xf32> to vector<1x10x32xf32>
    %cst_63 = arith.constant dense<0.000000e+00> : vector<1xf32>
    %103 = vector.multi_reduction <add>, %102, %cst_63 [1, 2] : vector<1x10x32xf32> to vector<1xf32>
    %104 = vector.shape_cast %103 : vector<1xf32> to vector<1x1x1xf32>
    %105 = vector.extract %104[0, 0, 0] : f32 from vector<1x1x1xf32>
    %cst_64 = arith.constant 3.200000e+02 : f32
    %106 = arith.divf %105, %cst_64 : f32
    %107 = arith.mulf %101, %101 : vector<10x32xf32>
    %108 = vector.shape_cast %107 : vector<10x32xf32> to vector<1x10x32xf32>
    %cst_65 = arith.constant dense<0.000000e+00> : vector<1xf32>
    %109 = vector.multi_reduction <add>, %108, %cst_65 [1, 2] : vector<1x10x32xf32> to vector<1xf32>
    %110 = vector.shape_cast %109 : vector<1xf32> to vector<1x1x1xf32>
    %111 = vector.extract %110[0, 0, 0] : f32 from vector<1x1x1xf32>
    %cst_66 = arith.constant 3.200000e+02 : f32
    %112 = arith.divf %111, %cst_66 : f32
    %113 = arith.mulf %106, %106 : f32
    %114 = arith.subf %112, %113 : f32
    %115 = vector.broadcast %106 : f32 to vector<10x32xf32>
    %116 = arith.subf %101, %115 : vector<10x32xf32>
    %cst_67 = arith.constant 9.99999974E-6 : f32
    %117 = arith.addf %114, %cst_67 : f32
    %118 = math.rsqrt %117 : f32
    %119 = vector.broadcast %118 : f32 to vector<10x32xf32>
    %120 = arith.mulf %116, %119 : vector<10x32xf32>
    %c0_68 = arith.constant 0 : index
    %c0_69 = arith.constant 0 : index
    %121 = vector.load %arg6[%c0_68, %c0_69] : memref<10x32xf32, #tpu.memory_space<vmem>>, vector<10x32xf32>
    %122 = arith.mulf %120, %121 : vector<10x32xf32>
    %c0_70 = arith.constant 0 : index
    %c0_71 = arith.constant 0 : index
    %123 = vector.load %arg7[%c0_70, %c0_71] : memref<10x32xf32, #tpu.memory_space<vmem>>, vector<10x32xf32>
    %124 = arith.addf %122, %123 : vector<10x32xf32>
    %cst_72 = arith.constant 0.000000e+00 : f32
    %125 = vector.broadcast %cst_72 : f32 to vector<10x32xf32>
    %126 = arith.maximumf %124, %125 : vector<10x32xf32>
    %c0_73 = arith.constant 0 : index
    %c0_74 = arith.constant 0 : index
    %c0_75 = arith.constant 0 : index
    %127 = vector.load %arg8[%c0_73, %c0_74, %c0_75] : memref<1x10x32xf32, #tpu.memory_space<vmem>>, vector<1x10x32xf32>
    %128 = vector.shape_cast %127 : vector<1x10x32xf32> to vector<10x32xf32>
    %129 = vector.shape_cast %126 : vector<10x32xf32> to vector<1x10x32xf32>
    tpu.vector_store %arg8[%c0_73, %c0_74, %c0_75], %129 {strides = array<i32>} : memref<1x10x32xf32, #tpu.memory_space<vmem>>, vector<1x10x32xf32>,
    return
  }
  func.func @transform_0(%arg0: i32) -> (i32, i32) {
    %c0_i32 = arith.constant 0 : i32
    %c0_i32_0 = arith.constant 0 : i32
    %c0_i32_1 = arith.constant 0 : i32
    return %c0_i32, %c0_i32_0 : i32, i32
  }
  func.func @transform_1(%arg0: i32) -> (i32, i32) {
    %c0_i32 = arith.constant 0 : i32
    %c0_i32_0 = arith.constant 0 : i32
    %c0_i32_1 = arith.constant 0 : i32
    return %c0_i32, %c0_i32_0 : i32, i32
  }
  func.func @transform_2(%arg0: i32) -> (i32, i32, i32, i32) {
    %c0_i32 = arith.constant 0 : i32
    %c0_i32_0 = arith.constant 0 : i32
    %c0_i32_1 = arith.constant 0 : i32
    %c0_i32_2 = arith.constant 0 : i32
    return %c0_i32, %arg0, %c0_i32_0, %c0_i32_1 : i32, i32, i32, i32
  }
  func.func @transform_3(%arg0: i32) -> (i32, i32) {
    %c0_i32 = arith.constant 0 : i32
    %c0_i32_0 = arith.constant 0 : i32
    %c0_i32_1 = arith.constant 0 : i32
    return %c0_i32, %c0_i32_0 : i32, i32
  }
  func.func @transform_4(%arg0: i32) -> (i32, i32) {
    %c0_i32 = arith.constant 0 : i32
    %c0_i32_0 = arith.constant 0 : i32
    %c0_i32_1 = arith.constant 0 : i32
    return %c0_i32, %c0_i32_0 : i32, i32
  }
  func.func @transform_5(%arg0: i32) -> (i32, i32) {
    %c0_i32 = arith.constant 0 : i32
    %c0_i32_0 = arith.constant 0 : i32
    %c0_i32_1 = arith.constant 0 : i32
    return %c0_i32, %c0_i32_0 : i32, i32
  }
  func.func @transform_6(%arg0: i32) -> (i32, i32) {
    %c0_i32 = arith.constant 0 : i32
    %c0_i32_0 = arith.constant 0 : i32
    %c0_i32_1 = arith.constant 0 : i32
    return %c0_i32, %c0_i32_0 : i32, i32
  }
  func.func @transform_7(%arg0: i32) -> (i32, i32, i32) {
    %c0_i32 = arith.constant 0 : i32
    %c0_i32_0 = arith.constant 0 : i32
    %c0_i32_1 = arith.constant 0 : i32
    return %arg0, %c0_i32, %c0_i32_0 : i32, i32, i32
  }
  func.func @transform_8(%arg0: i32) -> (i32, i32, i32, i32) {
    %c0_i32 = arith.constant 0 : i32
    %c0_i32_0 = arith.constant 0 : i32
    %c0_i32_1 = arith.constant 0 : i32
    %c0_i32_2 = arith.constant 0 : i32
    return %c0_i32, %arg0, %c0_i32_0, %c0_i32_1 : i32, i32, i32, i32
  }
}

</mosaic_0001>

<llo_original>
// kernel: tpu_custom_call.1
$region0: #{tpu_custom_call.1}
  #allocation0 [shape = 'u32[]', space=smem, size = 0x4, offset = 0x4, fixed_abs, tag = 'smem constant byte address 0x4 - core index']
  #allocation1 [shape = 'u32[144,128]{1,0:T(1,128)}', space=vmem, size = 0x12000, scoped, tag = 'internal scratch']
  %s0 = inlined_call_operand.vmem [shape: f32[4,4], index: 0, kind: input, shape index: {}]
  %s1 = inlined_call_operand.vmem [shape: f32[2,3], index: 1, kind: input, shape index: {}]
  %s2 = inlined_call_operand.vmem [shape: f32[3,2,10,32], index: 2, kind: input, shape index: {}]
  %s3 = inlined_call_operand.vmem [shape: f32[64,32], index: 3, kind: input, shape index: {}]
  %s4 = inlined_call_operand.vmem [shape: f32[1,32], index: 4, kind: input, shape index: {}]
  %s5 = inlined_call_operand.vmem [shape: f32[10,32], index: 5, kind: input, shape index: {}]
  %s6 = inlined_call_operand.vmem [shape: f32[10,32], index: 6, kind: input, shape index: {}]
  %s7 = inlined_call_operand.vmem [shape: f32[2,10,32], index: 7, kind: output, shape index: {0}]
  %s8 = inlined_call_operand.vmem [shape: f32[2,2,10,32], index: 8, kind: output, shape index: {1}]
  %9 = xla_tuple %s7, %s8
  %s10 = sld [smem:[#allocation0]]
  $region149: #{tpu_custom_call.1} parent=0
    _
  %s12 = ssub.s32 1, %s10
  %s13 = scalar_select 0, %s12, %s10
  $region1: #{tpu_custom_call.1} parent=0
    #allocation2 [shape = 'u8[2048]{0}', space=smem, size = 0x800, scoped, tag = 'input window, operand 0, single buffered']
    #allocation3 [shape = 's32[2]{0}', space=sflag, size = 0x8, scoped, tag = 'scoped memory for tpu_custom_call.1']
    #allocation4 [shape = 'u8[1024]{0}', space=smem, size = 0x400, scoped, tag = 'input window, operand 1, single buffered']
    #allocation5 [shape = 's32[1]{0}', space=sflag, size = 0x4, scoped, tag = 'scoped memory for tpu_custom_call.1']
    #allocation6 [shape = 'u8[49152]{0}', space=vmem, size = 0xc000, scoped, tag = 'input window, operand 2']
    #allocation7 [shape = 'u8[32768]{0}', space=vmem, size = 0x8000, scoped, tag = 'output window, operand 1']
    %14 = vsyncpa [#allocation3], 0
    %15 = vsyncpa [#allocation5], 0
    loop: start=0, step=1, limit=4
    $region2: #{tpu_custom_call.1} parent=1 // loop_pre_header
      _
    $region3: #{tpu_custom_call.1} parent=1 // loop_header
      %s17 = sphi 0, %s21
      %p18 = scmp.ge.s32.totalorder %s17, 4
      %s25 = sphi 0, %s25
      %s27 = sphi 0, %s25
      %s28 = sphi 0, %s27
      %s42 = sphi 0, %s28
      %s46 = sphi 0, %s46
      %s48 = sphi 0, %s46
      %s49 = sphi 0, %s48
      %s63 = sphi 0, %s49
      %s69 = sphi 0, %s71
      %s72 = sphi 0, %s69
      %s73 = sphi 0, %s72
      %s89 = sphi 0, %s73
      %s93 = sphi 0, %s93
      %s95 = sphi 0, %s93
      %s96 = sphi 0, %s95
      %s110 = sphi 0, %s96
      %s114 = sphi 0, %s114
      %s116 = sphi 0, %s114
      %s117 = sphi 0, %s116
      %s131 = sphi 0, %s117
      %s135 = sphi 0, %s135
      %s137 = sphi 0, %s135
      %s138 = sphi 0, %s137
      %s152 = sphi 0, %s138
      %s156 = sphi 0, %s156
      %s158 = sphi 0, %s156
      %s159 = sphi 0, %s158
      %s173 = sphi 0, %s159
      %s179 = sphi 0, %s181
      %s182 = sphi 0, %s179
      %s183 = sphi 0, %s182
      %s199 = sphi 0, %s183
      %s205 = sphi 0, %s207
      %s208 = sphi 0, %s205
      %s209 = sphi 0, %s208
      %s225 = sphi 0, %s209
    $region4: #{tpu_custom_call.1} parent=1 // loop_header_branch
      %20 = sbr.rel (%p18) target = $region8
    $region5: #{tpu_custom_call.1} parent=1 // loop_body
      %s22 = ssub.s32 %s17, 1
      %s23 = ssub.s32 %s17, 2
      %s24 = sadd.s32 %s17, 1
      %s26 = sadd.s32 %s25, 1
      %p29 = scmp.eq.s32.totalorder %s17, 1
      %p30 = scmp.ne.s32.totalorder %s25, %s27
      %p31 = scmp.eq.s32.totalorder %s17, 0
      %p32 = por %p30, %p31
      %p33 = scmp.ne.s32.totalorder %s25, %s27
      %p34 = scmp.eq.s32.totalorder %s22, 1
      %p35 = por %p33, %p34
      %p36 = scmp.ne.s32.totalorder %s27, %s28
      %p37 = scmp.eq.s32.totalorder %s22, 0
      %p38 = por %p36, %p37
      %p39 = scmp.ne.s32.totalorder %s27, %s28
      %p40 = scmp.eq.s32.totalorder %s23, 1
      %p41 = por %p39, %p40
      %p43 = scmp.ne.s32.totalorder %s28, %s42
      %p44 = scmp.eq.s32.totalorder %s23, 0
      %p45 = por %p43, %p44
      %s47 = sadd.s32 %s46, 1
      %p50 = scmp.eq.s32.totalorder %s17, 1
      %p51 = scmp.ne.s32.totalorder %s46, %s48
      %p52 = scmp.eq.s32.totalorder %s17, 0
      %p53 = por %p51, %p52
      %p54 = scmp.ne.s32.totalorder %s46, %s48
      %p55 = scmp.eq.s32.totalorder %s22, 1
      %p56 = por %p54, %p55
      %p57 = scmp.ne.s32.totalorder %s48, %s49
      %p58 = scmp.eq.s32.totalorder %s22, 0
      %p59 = por %p57, %p58
      %p60 = scmp.ne.s32.totalorder %s48, %s49
      %p61 = scmp.eq.s32.totalorder %s23, 1
      %p62 = por %p60, %p61
      %p64 = scmp.ne.s32.totalorder %s49, %s63
      %p65 = scmp.eq.s32.totalorder %s23, 0
      %p66 = por %p64, %p65
      %s67 = ssub.s32 %s17, %s24
      %p68 = scmp.eq.s32.totalorder %s67, 0
      %s70 = sadd.s32 %s69, 1
      %s71 = scalar_select %p68, %s69, %s70
      %p74 = pneg %p68
      %p75 = scmp.eq.s32.totalorder %s17, 1
      %p76 = por %p74, %p75
      %p77 = scmp.ne.s32.totalorder %s69, %s72
      %p78 = scmp.eq.s32.totalorder %s17, 0
      %p79 = por %p77, %p78
      %p80 = scmp.ne.s32.totalorder %s69, %s72
      %p81 = scmp.eq.s32.totalorder %s22, 1
      %p82 = por %p80, %p81
      %p83 = scmp.ne.s32.totalorder %s72, %s73
      %p84 = scmp.eq.s32.totalorder %s22, 0
      %p85 = por %p83, %p84
      %p86 = scmp.ne.s32.totalorder %s72, %s73
      %p87 = scmp.eq.s32.totalorder %s23, 1
      %p88 = por %p86, %p87
      %p90 = scmp.ne.s32.totalorder %s73, %s89
      %p91 = scmp.eq.s32.totalorder %s23, 0
      %p92 = por %p90, %p91
      %s94 = sadd.s32 %s93, 1
      %p97 = scmp.eq.s32.totalorder %s17, 1
      %p98 = scmp.ne.s32.totalorder %s93, %s95
      %p99 = scmp.eq.s32.totalorder %s17, 0
      %p100 = por %p98, %p99
      %p101 = scmp.ne.s32.totalorder %s93, %s95
      %p102 = scmp.eq.s32.totalorder %s22, 1
      %p103 = por %p101, %p102
      %p104 = scmp.ne.s32.totalorder %s95, %s96
      %p105 = scmp.eq.s32.totalorder %s22, 0
      %p106 = por %p104, %p105
      %p107 = scmp.ne.s32.totalorder %s95, %s96
      %p108 = scmp.eq.s32.totalorder %s23, 1
      %p109 = por %p107, %p108
      %p111 = scmp.ne.s32.totalorder %s96, %s110
      %p112 = scmp.eq.s32.totalorder %s23, 0
      %p113 = por %p111, %p112
      %s115 = sadd.s32 %s114, 1
      %p118 = scmp.eq.s32.totalorder %s17, 1
      %p119 = scmp.ne.s32.totalorder %s114, %s116
      %p120 = scmp.eq.s32.totalorder %s17, 0
      %p121 = por %p119, %p120
      %p122 = scmp.ne.s32.totalorder %s114, %s116
      %p123 = scmp.eq.s32.totalorder %s22, 1
      %p124 = por %p122, %p123
      %p125 = scmp.ne.s32.totalorder %s116, %s117
      %p126 = scmp.eq.s32.totalorder %s22, 0
      %p127 = por %p125, %p126
      %p128 = scmp.ne.s32.totalorder %s116, %s117
      %p129 = scmp.eq.s32.totalorder %s23, 1
      %p130 = por %p128, %p129
      %p132 = scmp.ne.s32.totalorder %s117, %s131
      %p133 = scmp.eq.s32.totalorder %s23, 0
      %p134 = por %p132, %p133
      %s136 = sadd.s32 %s135, 1
      %p139 = scmp.eq.s32.totalorder %s17, 1
      %p140 = scmp.ne.s32.totalorder %s135, %s137
      %p141 = scmp.eq.s32.totalorder %s17, 0
      %p142 = por %p140, %p141
      %p143 = scmp.ne.s32.totalorder %s135, %s137
      %p144 = scmp.eq.s32.totalorder %s22, 1
      %p145 = por %p143, %p144
      %p146 = scmp.ne.s32.totalorder %s137, %s138
      %p147 = scmp.eq.s32.totalorder %s22, 0
      %p148 = por %p146, %p147
      %p149 = scmp.ne.s32.totalorder %s137, %s138
      %p150 = scmp.eq.s32.totalorder %s23, 1
      %p151 = por %p149, %p150
      %p153 = scmp.ne.s32.totalorder %s138, %s152
      %p154 = scmp.eq.s32.totalorder %s23, 0
      %p155 = por %p153, %p154
      %s157 = sadd.s32 %s156, 1
      %p160 = scmp.eq.s32.totalorder %s17, 1
      %p161 = scmp.ne.s32.totalorder %s156, %s158
      %p162 = scmp.eq.s32.totalorder %s17, 0
      %p163 = por %p161, %p162
      %p164 = scmp.ne.s32.totalorder %s156, %s158
      %p165 = scmp.eq.s32.totalorder %s22, 1
      %p166 = por %p164, %p165
      %p167 = scmp.ne.s32.totalorder %s158, %s159
      %p168 = scmp.eq.s32.totalorder %s22, 0
      %p169 = por %p167, %p168
      %p170 = scmp.ne.s32.totalorder %s158, %s159
      %p171 = scmp.eq.s32.totalorder %s23, 1
      %p172 = por %p170, %p171
      %p174 = scmp.ne.s32.totalorder %s159, %s173
      %p175 = scmp.eq.s32.totalorder %s23, 0
      %p176 = por %p174, %p175
      %s177 = ssub.s32 %s17, %s24
      %p178 = scmp.eq.s32.totalorder %s177, 0
      %s180 = sadd.s32 %s179, 1
      %s181 = scalar_select %p178, %s179, %s180
      %p184 = pneg %p178
      %p185 = scmp.eq.s32.totalorder %s17, 1
      %p186 = por %p184, %p185
      %p187 = scmp.ne.s32.totalorder %s179, %s182
      %p188 = scmp.eq.s32.totalorder %s17, 0
      %p189 = por %p187, %p188
      %p190 = scmp.ne.s32.totalorder %s179, %s182
      %p191 = scmp.eq.s32.totalorder %s22, 1
      %p192 = por %p190, %p191
      %p193 = scmp.ne.s32.totalorder %s182, %s183
      %p194 = scmp.eq.s32.totalorder %s22, 0
      %p195 = por %p193, %p194
      %p196 = scmp.ne.s32.totalorder %s182, %s183
      %p197 = scmp.eq.s32.totalorder %s23, 1
      %p198 = por %p196, %p197
      %p200 = scmp.ne.s32.totalorder %s183, %s199
      %p201 = scmp.eq.s32.totalorder %s23, 0
      %p202 = por %p200, %p201
      %s203 = ssub.s32 %s17, %s24
      %p204 = scmp.eq.s32.totalorder %s203, 0
      %s206 = sadd.s32 %s205, 1
      %s207 = scalar_select %p204, %s205, %s206
      %p210 = pneg %p204
      %p211 = scmp.eq.s32.totalorder %s17, 1
      %p212 = por %p210, %p211
      %p213 = scmp.ne.s32.totalorder %s205, %s208
      %p214 = scmp.eq.s32.totalorder %s17, 0
      %p215 = por %p213, %p214
      %p216 = scmp.ne.s32.totalorder %s205, %s208
      %p217 = scmp.eq.s32.totalorder %s22, 1
      %p218 = por %p216, %p217
      %p219 = scmp.ne.s32.totalorder %s208, %s209
      %p220 = scmp.eq.s32.totalorder %s22, 0
      %p221 = por %p219, %p220
      %p222 = scmp.ne.s32.totalorder %s208, %s209
      %p223 = scmp.eq.s32.totalorder %s23, 1
      %p224 = por %p222, %p223
      %p226 = scmp.ne.s32.totalorder %s209, %s225
      %p227 = scmp.eq.s32.totalorder %s23, 0
      %p228 = por %p226, %p227
      %p229 = scmp.le.s32.totalorder 1, %s17
      %p230 = scmp.lt.s32.totalorder %s17, 3
      %p231 = pnand %p229, %p230
      %p232 = pneg %p231
      // Predicated region
      $region9: #{tpu_custom_call.1} parent=5 // pred_check
        _
      $region10: #{tpu_custom_call.1} parent=5 // pred_check_branch
        %234 = sbr.rel (%p231) target = $region12
      $region11: #{tpu_custom_call.1} parent=5 // pred_region
        %s235 = ssub.s32 %s17, 1
        // Predicated region
        $region13: #{tpu_custom_call.1} parent=11 // pred_check
          %p236 = pneg %p38
        $region14: #{tpu_custom_call.1} parent=11 // pred_check_branch
          %238 = sbr.rel (%p236) target = $region16
        $region15: #{tpu_custom_call.1} parent=11 // pred_region
          %s240 = ssub.s32 64, 64
          %241 = vsyncadd [#allocation3], %s240
          %s243 = sshll.u32 %s0, 4
          %s244 = int_to_ptr.vmem [resolvable:$true] %s243
          %246 = dma.vmem_to_smem %s244, 64, [#allocation2], [#allocation3]
        $region16: #{tpu_custom_call.1} parent=11 // pred_fallthru
          _
        // Predicated region
        $region17: #{tpu_custom_call.1} parent=11 // pred_check
          %p247 = pneg %p59
        $region18: #{tpu_custom_call.1} parent=11 // pred_check_branch
          %249 = sbr.rel (%p247) target = $region20
        $region19: #{tpu_custom_call.1} parent=11 // pred_region
          %s251 = ssub.s32 32, 32
          %252 = vsyncadd [#allocation5], %s251
          %s254 = sshll.u32 %s1, 4
          %s255 = int_to_ptr.vmem [resolvable:$true] %s254
          %257 = dma.vmem_to_smem %s255, 32, [#allocation4], [#allocation5]
        $region20: #{tpu_custom_call.1} parent=11 // pred_fallthru
          _
        // Predicated region
        $region21: #{tpu_custom_call.1} parent=11 // pred_check
          %p258 = pneg %p106
        $region22: #{tpu_custom_call.1} parent=11 // pred_check_branch
          %260 = sbr.rel (%p258) target = $region24
        $region23: #{tpu_custom_call.1} parent=11 // pred_region
          _
        $region24: #{tpu_custom_call.1} parent=11 // pred_fallthru
          _
        // Predicated region
        $region25: #{tpu_custom_call.1} parent=11 // pred_check
          %p261 = pneg %p127
        $region26: #{tpu_custom_call.1} parent=11 // pred_check_branch
          %263 = sbr.rel (%p261) target = $region28
        $region27: #{tpu_custom_call.1} parent=11 // pred_region
          _
        $region28: #{tpu_custom_call.1} parent=11 // pred_fallthru
          _
        // Predicated region
        $region29: #{tpu_custom_call.1} parent=11 // pred_check
          %p264 = pneg %p148
        $region30: #{tpu_custom_call.1} parent=11 // pred_check_branch
          %266 = sbr.rel (%p264) target = $region32
        $region31: #{tpu_custom_call.1} parent=11 // pred_region
          _
        $region32: #{tpu_custom_call.1} parent=11 // pred_fallthru
          _
        // Predicated region
        $region33: #{tpu_custom_call.1} parent=11 // pred_check
          %p267 = pneg %p169
        $region34: #{tpu_custom_call.1} parent=11 // pred_check_branch
          %269 = sbr.rel (%p267) target = $region36
        $region35: #{tpu_custom_call.1} parent=11 // pred_region
          _
        $region36: #{tpu_custom_call.1} parent=11 // pred_fallthru
          _
      $region12: #{tpu_custom_call.1} parent=5 // pred_fallthru
        _
      %p270 = scmp.lt.s32.totalorder %s17, 2
      // Predicated region
      $region37: #{tpu_custom_call.1} parent=5 // pred_check
        %p271 = pneg %p270
      $region38: #{tpu_custom_call.1} parent=5 // pred_check_branch
        %273 = sbr.rel (%p271) target = $region40
      $region39: #{tpu_custom_call.1} parent=5 // pred_region
        // Predicated region
        $region41: #{tpu_custom_call.1} parent=39 // pred_check
          %p274 = pneg %p79
        $region42: #{tpu_custom_call.1} parent=39 // pred_check_branch
          %276 = sbr.rel (%p274) target = $region44
        $region43: #{tpu_custom_call.1} parent=39 // pred_region
          %s277 = sand.u32 %s69, 1
          %s278 = sand.u32 %s69, 1
          %s279 = smul.addr %s278, 48
          %s280 = scalar_lea.vmem [#allocation6], %s279
          %s281 = smul.addr %s17, 2
          %s282 = smul.addr %s281, 8
          %s283 = scalar_lea.vmem %s2, %s282
          // Predicated region
          $region45: #{tpu_custom_call.1} parent=43 // pred_check
            _
          $region46: #{tpu_custom_call.1} parent=43 // pred_check_branch
            %285 = sbr.rel (0) target = $region48
          $region47: #{tpu_custom_call.1} parent=43 // pred_region
            // Predicated region
            $region49: #{tpu_custom_call.1} parent=47 // pred_check
              _
            $region50: #{tpu_custom_call.1} parent=47 // pred_check_branch
              %287 = sbr.rel (0) target = $region52
            $region51: #{tpu_custom_call.1} parent=47 // pred_region
              // Predicated region
              $region64: #{tpu_custom_call.1} parent=51 // pred_check
                _
              $region65: #{tpu_custom_call.1} parent=51 // pred_check_branch
                %312 = sbr.rel (0) target = $region67
              $region66: #{tpu_custom_call.1} parent=51 // pred_region
                loop: start=0, step=1, limit=1
                $region68: #{tpu_custom_call.1} parent=66 // loop_pre_header
                  _
                $region69: #{tpu_custom_call.1} parent=66 // loop_header
                  %s314 = sphi 0, %s318
                  %p315 = scmp.ge.s32.totalorder %s314, 1
                  %s319 = sphi %s283, %s283
                  %s320 = sphi %s280, %s280
                $region70: #{tpu_custom_call.1} parent=66 // loop_header_branch
                  %317 = sbr.rel (%p315) target = $region74
                $region71: #{tpu_custom_call.1} parent=66 // loop_body
                  %v321 = vld [vmem:[%s319] sm:$0xff]
                  %322 = vst [vmem:[%s320] sm:$0xff] %v321
                  %v323 = vld [vmem:[%s319 + $0x8] sm:$0xff]
                  %324 = vst [vmem:[%s320 + $0x8] sm:$0xff] %v323
                  %v325 = vld [vmem:[%s319 + $0x20] sm:$0xff]
                  %326 = vst [vmem:[%s320 + $0x10] sm:$0xff] %v325
                  %v327 = vld [vmem:[%s319 + $0x28] sm:$0xff]
                  %328 = vst [vmem:[%s320 + $0x18] sm:$0xff] %v327
                  %v329 = vld [vmem:[%s319 + $0x40] sm:$0xff]
                  %330 = vst [vmem:[%s320 + $0x20] sm:$0xff] %v329
                  %v331 = vld [vmem:[%s319 + $0x48] sm:$0xff]
                  %332 = vst [vmem:[%s320 + $0x28] sm:$0xff] %v331
                $region72: #{tpu_custom_call.1} parent=66 // loop_footer
                  %s318 = sadd.s32 1, %s314
                $region73: #{tpu_custom_call.1} parent=66 // loop_footer_branch
                  %313 = sbr.rel target = $region69
                $region74: #{tpu_custom_call.1} parent=66 // loop_exit
                  _
              $region67: #{tpu_custom_call.1} parent=51 // pred_fallthru
                _
              // Predicated region
              $region75: #{tpu_custom_call.1} parent=51 // pred_check
                _
              $region76: #{tpu_custom_call.1} parent=51 // pred_check_branch
                %334 = sbr.rel target = $region78
              $region77: #{tpu_custom_call.1} parent=51 // pred_region
                _
              $region78: #{tpu_custom_call.1} parent=51 // pred_fallthru
                _
            $region52: #{tpu_custom_call.1} parent=47 // pred_fallthru
              _
            // Predicated region
            $region53: #{tpu_custom_call.1} parent=47 // pred_check
              _
            $region54: #{tpu_custom_call.1} parent=47 // pred_check_branch
              %289 = sbr.rel target = $region56
            $region55: #{tpu_custom_call.1} parent=47 // pred_region
              loop: start=0, step=1, limit=1
              $region57: #{tpu_custom_call.1} parent=55 // loop_pre_header
                _
              $region58: #{tpu_custom_call.1} parent=55 // loop_header
                %s292 = sphi 0, %s296
                %p293 = scmp.ge.s32.totalorder %s292, 1
                %s297 = sphi %s283, %s283
                %s298 = sphi %s280, %s280
              $region59: #{tpu_custom_call.1} parent=55 // loop_header_branch
                %295 = sbr.rel (%p293) target = $region63
              $region60: #{tpu_custom_call.1} parent=55 // loop_body
                %v299 = vld [vmem:[%s297] sm:$0xff]
                %300 = vst [vmem:[%s298] sm:$0xff] %v299
                %v301 = vld [vmem:[%s297 + $0x8] sm:$0xff]
                %302 = vst [vmem:[%s298 + $0x8] sm:$0xff] %v301
                %v303 = vld [vmem:[%s297 + $0x20] sm:$0xff]
                %304 = vst [vmem:[%s298 + $0x10] sm:$0xff] %v303
                %v305 = vld [vmem:[%s297 + $0x28] sm:$0xff]
                %306 = vst [vmem:[%s298 + $0x18] sm:$0xff] %v305
                %v307 = vld [vmem:[%s297 + $0x40] sm:$0xff]
                %308 = vst [vmem:[%s298 + $0x20] sm:$0xff] %v307
                %v309 = vld [vmem:[%s297 + $0x48] sm:$0xff]
                %310 = vst [vmem:[%s298 + $0x28] sm:$0xff] %v309
              $region61: #{tpu_custom_call.1} parent=55 // loop_footer
                %s296 = sadd.s32 1, %s292
              $region62: #{tpu_custom_call.1} parent=55 // loop_footer_branch
                %291 = sbr.rel target = $region58
              $region63: #{tpu_custom_call.1} parent=55 // loop_exit
                _
            $region56: #{tpu_custom_call.1} parent=47 // pred_fallthru
              _
          $region48: #{tpu_custom_call.1} parent=43 // pred_fallthru
            _
          %335 = vnop
        $region44: #{tpu_custom_call.1} parent=39 // pred_fallthru
          _
      $region40: #{tpu_custom_call.1} parent=5 // pred_fallthru
        _
      %p336 = scmp.le.s32.totalorder 1, %s17
      %p337 = scmp.lt.s32.totalorder %s17, 3
      %p338 = pnand %p336, %p337
      %p339 = pneg %p338
      // Predicated region
      $region79: #{tpu_custom_call.1} parent=5 // pred_check
        _
      $region80: #{tpu_custom_call.1} parent=5 // pred_check_branch
        %341 = sbr.rel (%p338) target = $region82
      $region81: #{tpu_custom_call.1} parent=5 // pred_region
        %s342 = ssub.s32 %s17, 1
        // Predicated region
        $region83: #{tpu_custom_call.1} parent=81 // pred_check
          %p343 = pneg %p38
        $region84: #{tpu_custom_call.1} parent=81 // pred_check_branch
          %345 = sbr.rel (%p343) target = $region86
        $region85: #{tpu_custom_call.1} parent=81 // pred_region
          %346 = dma.done [#allocation3], 64
        $region86: #{tpu_custom_call.1} parent=81 // pred_fallthru
          _
        // Predicated region
        $region87: #{tpu_custom_call.1} parent=81 // pred_check
          %p347 = pneg %p59
        $region88: #{tpu_custom_call.1} parent=81 // pred_check_branch
          %349 = sbr.rel (%p347) target = $region90
        $region89: #{tpu_custom_call.1} parent=81 // pred_region
          %350 = dma.done [#allocation5], 32
        $region90: #{tpu_custom_call.1} parent=81 // pred_fallthru
          _
        %s351 = sand.u32 %s72, 1
        %s352 = sand.u32 %s72, 1
        %s353 = smul.addr %s352, 48
        %s354 = scalar_lea.vmem [#allocation6], %s353
        // Predicated region
        $region91: #{tpu_custom_call.1} parent=81 // pred_check
          %p355 = pneg %p85
        $region92: #{tpu_custom_call.1} parent=81 // pred_check_branch
          %357 = sbr.rel (%p355) target = $region94
        $region93: #{tpu_custom_call.1} parent=81 // pred_region
          _
        $region94: #{tpu_custom_call.1} parent=81 // pred_fallthru
          _
        %358 = sfence
        %p359 = pneg %p38
        %p360 = pneg %p35
        %p361 = pneg %p59
        %p362 = pneg %p56
        %s363 = sand.u32 %s72, 1
        %s364 = sand.u32 %s72, 1
        %s365 = smul.addr %s364, 48
        %s366 = scalar_lea.vmem [#allocation6], %s365
        %p367 = pneg %p85
        %p368 = pneg %p82
        %p369 = pneg %p106
        %p370 = pneg %p103
        %p371 = pneg %p127
        %p372 = pneg %p124
        %p373 = pneg %p148
        %p374 = pneg %p145
        %p375 = pneg %p169
        %p376 = pneg %p166
        %p377 = pneg %p195
        %p378 = pneg %p192
        %p379 = scmp.lt.s32.totalorder %s22, 1
        %s380 = scalar_select %p379, %s22, 1
        %s381 = smul.addr %s380, 2
        %s382 = smul.addr %s381, 8
        %s383 = scalar_lea.vmem %s7, %s382
        %p384 = pneg %p221
        %p385 = pneg %p218
        %s386 = sand.u32 %s208, 1
        %s387 = sand.u32 %s208, 1
        %s388 = smul.addr %s387, 32
        %s389 = scalar_lea.vmem [#allocation7], %s388
        %p390 = scmp.lt.s32.totalorder %s22, 1
        %s391 = scalar_select %p390, %s22, 1
        %s392 = smul.addr %s391, 2
        %s393 = smul.addr %s392, 8
        %s394 = scalar_lea.vmem %s7, %s393
        %v395 = vld [vmem:[%s354] sm:$0xff]
        %v396 = vld [vmem:[%s354 + $0x8] sm:$0x3]
        %s397 = scalar_lea.vmem %s354, 16 [#allocation6]
        %v398 = vld [vmem:[%s397] sm:$0xff]
        %v399 = vld [vmem:[%s397 + $0x8] sm:$0x3]
        %s400 = scalar_lea.vmem %s354, 32 [#allocation6]
        %v401 = vld [vmem:[%s400] sm:$0xff]
        %v402 = vld [vmem:[%s400 + $0x8] sm:$0x3]
        %s403 = sld [smem:[#allocation2]]
        %v404 = vstv %s403
        %v405 = vmul.f32 %v404, %v395
        %v406 = vmul.f32 %v404, %v396
        %s407 = sld [smem:[#allocation2 + $0x80]]
        %v408 = vstv %s407
        %v409 = vmul.f32 %v408, %v395
        %v410 = vmul.f32 %v408, %v396
        %s411 = sld [smem:[#allocation2 + $0x1]]
        %v412 = vstv %s411
        %v413 = vmul.f32 %v412, %v398
        %v414 = vmul.f32 %v412, %v399
        %v415 = vadd.f32 %v405, %v413
        %v416 = vadd.f32 %v406, %v414
        %s417 = sld [smem:[#allocation2 + $0x81]]
        %v418 = vstv %s417
        %v419 = vmul.f32 %v418, %v398
        %v420 = vmul.f32 %v418, %v399
        %v421 = vadd.f32 %v409, %v419
        %v422 = vadd.f32 %v410, %v420
        %s423 = sld [smem:[#allocation2 + $0x2]]
        %v424 = vstv %s423
        %v425 = vmul.f32 %v424, %v401
        %v426 = vmul.f32 %v424, %v402
        %v427 = vadd.f32 %v415, %v425
        %v428 = vadd.f32 %v416, %v426
        %s429 = sld [smem:[#allocation2 + $0x82]]
        %v430 = vstv %s429
        %v431 = vmul.f32 %v430, %v401
        %v432 = vmul.f32 %v430, %v402
        %v433 = vadd.f32 %v421, %v431
        %v434 = vadd.f32 %v422, %v432
        %s435 = sld [smem:[#allocation4]]
        %v436 = vadd.f32 %v427, %v433
        %v437 = vadd.f32 %v428, %v434
        %v438 = vstv %s435
        %v439 = vmul.f32 %v438, %v436
        %v440 = vmul.f32 %v438, %v437
        %s441 = sld [smem:[#allocation4 + $0x1]]
        %v442 = vmul.f32 %v427, %v433
        %v443 = vmul.f32 %v428, %v434
        %v444 = vstv %s441
        %v445 = vmul.f32 %v444, %v442
        %v446 = vmul.f32 %v444, %v443
        %v447 = vadd.f32 %v439, %v445
        %v448 = vadd.f32 %v440, %v446
        %s449 = sld [smem:[#allocation4 + $0x2]]
        %v450 = vmax.f32 %v427, %v433
        %v451 = vmax.f32 %v428, %v434
        %v452 = vstv %s449
        %v453 = vmul.f32 %v452, %v450
        %v454 = vmul.f32 %v452, %v451
        %v455 = vadd.f32 %v447, %v453
        %v456 = vadd.f32 %v448, %v454
        %vm457 = vcmask 261120
        %458 = vst.msk [vmem:[%s389] sm:$0xff] %vm457, %v455
        %vm459 = vcmask 254976
        %460 = vst.msk [vmem:[%s389 + $0x8] sm:$0x3] %vm459, %v456
        %s461 = sld [smem:[#allocation2 + $0x100]]
        %v462 = vstv %s461
        %v463 = vmul.f32 %v462, %v395
        %v464 = vmul.f32 %v462, %v396
        %s465 = sld [smem:[#allocation2 + $0x180]]
        %v466 = vstv %s465
        %v467 = vmul.f32 %v466, %v395
        %v468 = vmul.f32 %v466, %v396
        %s469 = sld [smem:[#allocation2 + $0x101]]
        %v470 = vstv %s469
        %v471 = vmul.f32 %v470, %v398
        %v472 = vmul.f32 %v470, %v399
        %v473 = vadd.f32 %v463, %v471
        %v474 = vadd.f32 %v464, %v472
        %s475 = sld [smem:[#allocation2 + $0x181]]
        %v476 = vstv %s475
        %v477 = vmul.f32 %v476, %v398
        %v478 = vmul.f32 %v476, %v399
        %v479 = vadd.f32 %v467, %v477
        %v480 = vadd.f32 %v468, %v478
        %s481 = sld [smem:[#allocation2 + $0x102]]
        %v482 = vstv %s481
        %v483 = vmul.f32 %v482, %v401
        %v484 = vmul.f32 %v482, %v402
        %v485 = vadd.f32 %v473, %v483
        %v486 = vadd.f32 %v474, %v484
        %s487 = sld [smem:[#allocation2 + $0x182]]
        %v488 = vstv %s487
        %v489 = vmul.f32 %v488, %v401
        %v490 = vmul.f32 %v488, %v402
        %v491 = vadd.f32 %v479, %v489
        %v492 = vadd.f32 %v480, %v490
        %s493 = sld [smem:[#allocation2 + $0x103]]
        %v494 = vstv %s493
        %v495 = vmul.f32 %v494, %v455
        %v496 = vmul.f32 %v494, %v456
        %v497 = vadd.f32 %v485, %v495
        %v498 = vadd.f32 %v486, %v496
        %s499 = sld [smem:[#allocation2 + $0x183]]
        %v500 = vstv %s499
        %v501 = vmul.f32 %v500, %v455
        %v502 = vmul.f32 %v500, %v456
        %v503 = vadd.f32 %v491, %v501
        %v504 = vadd.f32 %v492, %v502
        %s505 = sld [smem:[#allocation4 + $0x80]]
        %v506 = vadd.f32 %v497, %v503
        %v507 = vadd.f32 %v498, %v504
        %v508 = vstv %s505
        %v509 = vmul.f32 %v508, %v506
        %v510 = vmul.f32 %v508, %v507
        %s511 = sld [smem:[#allocation4 + $0x81]]
        %v512 = vmul.f32 %v497, %v503
        %v513 = vmul.f32 %v498, %v504
        %v514 = vstv %s511
        %v515 = vmul.f32 %v514, %v512
        %v516 = vmul.f32 %v514, %v513
        %v517 = vadd.f32 %v509, %v515
        %v518 = vadd.f32 %v510, %v516
        %s519 = sld [smem:[#allocation4 + $0x82]]
        %v520 = vmax.f32 %v497, %v503
        %v521 = vmax.f32 %v498, %v504
        %v522 = vstv %s519
        %v523 = vmul.f32 %v522, %v520
        %v524 = vmul.f32 %v522, %v521
        %v525 = vadd.f32 %v517, %v523
        %v526 = vadd.f32 %v518, %v524
        %s527 = scalar_lea.vmem %s389, 16 [#allocation7]
        %528 = vst.msk [vmem:[%s527] sm:$0xff] %vm457, %v525
        %529 = vst.msk [vmem:[%s527 + $0x8] sm:$0x3] %vm459, %v526
        %v530 = vld [vmem:[%s3] sm:$0xff]
        %v531 = vld [vmem:[%s3 + $0x8] sm:$0xff]
        %v532 = vld [vmem:[%s3 + $0x10] sm:$0xff]
        %v533 = vld [vmem:[%s3 + $0x18] sm:$0xff]
        %v534 = vld [vmem:[%s3 + $0x20] sm:$0xff]
        %v535 = vld [vmem:[%s3 + $0x28] sm:$0xff]
        %v536 = vld [vmem:[%s3 + $0x30] sm:$0xff]
        %v537 = vld [vmem:[%s3 + $0x38] sm:$0xff]
        %v539 = vsel %vm457, %v525, 0
        %v542 = vsel %vm457, %v526, 0
        %544 = vmatprep.subr.mxu0 0.0
        %545 = vmatpush1.msra.mxu0 %v534
        %546 = vmatprep.subr.mxu0 0.0
        %547 = vmatpush1.msra.mxu0 %v535
        %548 = vmatprep.subr.mxu0 0.0
        %549 = vmatpush1.msra.mxu0 %v536
        %550 = vmatprep.subr.mxu0 0.0
        %551 = vmatpush1.msra.mxu0 %v537
        %552 = vmatprep.subr.mxu0 0.0
        %553 = vmatpush1.msra.mxu0 0.0
        %554 = vmatprep.subr.mxu0 0.0
        %555 = vmatpush1.msra.mxu0 0.0
        %556 = vmatprep.subr.mxu0 0.0
        %557 = vmatpush1.msra.mxu0 0.0
        %558 = vmatprep.subr.mxu0 0.0
        %559 = vmatpush1.msra.mxu0 0.0
        %560 = vmatprep.subr.mxu0 0.0
        %561 = vmatpush1.msra.mxu0 0.0
        %562 = vmatprep.subr.mxu0 0.0
        %563 = vmatpush1.msra.mxu0 0.0
        %564 = vmatprep.subr.mxu0 0.0
        %565 = vmatpush1.msra.mxu0 0.0
        %566 = vmatprep.subr.mxu0 0.0
        %567 = vmatpush1.msra.mxu0 0.0
        %568 = vmatprep.subr.mxu0 0.0
        %569 = vmatpush1.msra.mxu0 0.0
        %570 = vmatprep.subr.mxu0 0.0
        %571 = vmatpush1.msra.mxu0 0.0
        %572 = vmatprep.subr.mxu0 0.0
        %573 = vmatpush1.msra.mxu0 0.0
        %574 = vmatprep.subr.mxu0 0.0
        %575 = vmatpush1.msra.mxu0 0.0
        %576 = vmatprep.subr.mxu0 0.0
        %577 = vmatpush1.msra.mxu0 0.0
        %578 = vmatprep.subr.mxu0 0.0
        %579 = vmatpush1.msra.mxu0 0.0
        %580 = vmatprep.subr.mxu0 0.0
        %581 = vmatpush1.msra.mxu0 0.0
        %582 = vmatprep.subr.mxu0 0.0
        %583 = vmatpush1.msra.mxu0 0.0
        %584 = vmatprep.subr.mxu0 0.0
        %585 = vmatpush1.msra.mxu0 0.0
        %586 = vmatprep.subr.mxu0 0.0
        %587 = vmatpush1.msra.mxu0 0.0
        %588 = vmatprep.subr.mxu0 0.0
        %589 = vmatpush1.msra.mxu0 0.0
        %590 = vmatprep.subr.mxu0 0.0
        %591 = vmatpush1.msra.mxu0 0.0
        %592 = vmatprep.subr.mxu0 0.0
        %593 = vmatpush1.msra.mxu0 0.0
        %594 = vmatprep.subr.mxu0 0.0
        %595 = vmatpush1.msra.mxu0 0.0
        %596 = vmatprep.subr.mxu0 0.0
        %597 = vmatpush1.msra.mxu0 0.0
        %598 = vmatprep.subr.mxu0 0.0
        %599 = vmatpush1.msra.mxu0 0.0
        %600 = vmatprep.subr.mxu0 0.0
        %601 = vmatpush1.msra.mxu0 0.0
        %602 = vmatprep.subr.mxu0 0.0
        %603 = vmatpush1.msra.mxu0 0.0
        %604 = vmatprep.subr.mxu0 0.0
        %605 = vmatpush1.msra.mxu0 0.0
        %606 = vmatprep.subr.mxu0 0.0
        %607 = vmatpush1.msra.mxu0 0.0
        %608 = vmatprep.mubr.f32.mxu0 0.0
        %609 = vmatmul.mubr.f32.gmra.mrb[0].mxu0 %v539
        %v610 = vpop.f32.mrb[0].mxu0
        %v611 = vadd.f32 0.0, %v610
        %v612 = vpop.f32.mrb[0].mxu0
        %613 = vmatprep.mubr.f32.mxu0 0.0
        %614 = vmatmul.mubr.f32.gmra.mrb[0].mxu0 %v542
        %v615 = vpop.f32.mrb[0].mxu0
        %v616 = vadd.f32 0.0, %v615
        %v617 = vpop.f32.mrb[0].mxu0
        %618 = vdwg.mxu0
        %v620 = vsel %vm457, %v455, 0
        %v623 = vsel %vm457, %v456, 0
        %625 = vmatprep.subr.mxu0 0.0
        %626 = vmatpush1.msra.mxu0 %v530
        %627 = vmatprep.subr.mxu0 0.0
        %628 = vmatpush1.msra.mxu0 %v531
        %629 = vmatprep.subr.mxu0 0.0
        %630 = vmatpush1.msra.mxu0 %v532
        %631 = vmatprep.subr.mxu0 0.0
        %632 = vmatpush1.msra.mxu0 %v533
        %633 = vmatprep.subr.mxu0 0.0
        %634 = vmatpush1.msra.mxu0 0.0
        %635 = vmatprep.subr.mxu0 0.0
        %636 = vmatpush1.msra.mxu0 0.0
        %637 = vmatprep.subr.mxu0 0.0
        %638 = vmatpush1.msra.mxu0 0.0
        %639 = vmatprep.subr.mxu0 0.0
        %640 = vmatpush1.msra.mxu0 0.0
        %641 = vmatprep.subr.mxu0 0.0
        %642 = vmatpush1.msra.mxu0 0.0
        %643 = vmatprep.subr.mxu0 0.0
        %644 = vmatpush1.msra.mxu0 0.0
        %645 = vmatprep.subr.mxu0 0.0
        %646 = vmatpush1.msra.mxu0 0.0
        %647 = vmatprep.subr.mxu0 0.0
        %648 = vmatpush1.msra.mxu0 0.0
        %649 = vmatprep.subr.mxu0 0.0
        %650 = vmatpush1.msra.mxu0 0.0
        %651 = vmatprep.subr.mxu0 0.0
        %652 = vmatpush1.msra.mxu0 0.0
        %653 = vmatprep.subr.mxu0 0.0
        %654 = vmatpush1.msra.mxu0 0.0
        %655 = vmatprep.subr.mxu0 0.0
        %656 = vmatpush1.msra.mxu0 0.0
        %657 = vmatprep.subr.mxu0 0.0
        %658 = vmatpush1.msra.mxu0 0.0
        %659 = vmatprep.subr.mxu0 0.0
        %660 = vmatpush1.msra.mxu0 0.0
        %661 = vmatprep.subr.mxu0 0.0
        %662 = vmatpush1.msra.mxu0 0.0
        %663 = vmatprep.subr.mxu0 0.0
        %664 = vmatpush1.msra.mxu0 0.0
        %665 = vmatprep.subr.mxu0 0.0
        %666 = vmatpush1.msra.mxu0 0.0
        %667 = vmatprep.subr.mxu0 0.0
        %668 = vmatpush1.msra.mxu0 0.0
        %669 = vmatprep.subr.mxu0 0.0
        %670 = vmatpush1.msra.mxu0 0.0
        %671 = vmatprep.subr.mxu0 0.0
        %672 = vmatpush1.msra.mxu0 0.0
        %673 = vmatprep.subr.mxu0 0.0
        %674 = vmatpush1.msra.mxu0 0.0
        %675 = vmatprep.subr.mxu0 0.0
        %676 = vmatpush1.msra.mxu0 0.0
        %677 = vmatprep.subr.mxu0 0.0
        %678 = vmatpush1.msra.mxu0 0.0
        %679 = vmatprep.subr.mxu0 0.0
        %680 = vmatpush1.msra.mxu0 0.0
        %681 = vmatprep.subr.mxu0 0.0
        %682 = vmatpush1.msra.mxu0 0.0
        %683 = vmatprep.subr.mxu0 0.0
        %684 = vmatpush1.msra.mxu0 0.0
        %685 = vmatprep.subr.mxu0 0.0
        %686 = vmatpush1.msra.mxu0 0.0
        %687 = vmatprep.subr.mxu0 0.0
        %688 = vmatpush1.msra.mxu0 0.0
        %689 = vmatprep.mubr.f32.mxu0 0.0
        %690 = vmatmul.mubr.f32.gmra.mrb[0].mxu0 %v620
        %v691 = vpop.f32.mrb[0].mxu0
        %v692 = vadd.f32 %v611, %v691
        %v693 = vpop.f32.mrb[0].mxu0
        %694 = vmatprep.mubr.f32.mxu0 0.0
        %695 = vmatmul.mubr.f32.gmra.mrb[0].mxu0 %v623
        %v696 = vpop.f32.mrb[0].mxu0
        %v697 = vadd.f32 %v616, %v696
        %v698 = vpop.f32.mrb[0].mxu0
        %699 = vdwg.mxu0
        %v700 = vld [vmem:[%s4] sm:$0x1]
        %v702 = vlaneseq
        %v703 = vshrl.u32 %v702, 7
        %v704 = vsub.s32 0, %v703
        %v705 = vrot.slane %v700, %v704
        %v707 = vadd.f32 %v692, %v705
        %v708 = vadd.f32 %v697, %v705
        %v709 = vsel %vm457, %v707, 0.0
        %v710 = vsel %vm459, %v708, 0.0
        %v711 = vadd.f32 %v709, %v710
        %712 = vadd.xlane.f32.xlu0 %v711
        %v713 = vpop.xlane.xlu0 %712
        %v714 = vrot.slane %v713, 4
        %v715 = vadd.f32 %v713, %v714
        %v716 = vrot.slane %v715, 2
        %v717 = vadd.f32 %v715, %v716
        %v718 = vrot.slane %v717, 1
        %v719 = vadd.f32 %v717, %v718
        %s720 = vtos %v719
        %v721 = vrcp.pop 320.0
        %s722 = vtos %v721
        %s723 = smul.f32 %s720, %s722
        %v724 = vmul.f32 %v707, %v707
        %v725 = vmul.f32 %v708, %v708
        %v726 = vsel %vm457, %v724, 0.0
        %v727 = vsel %vm459, %v725, 0.0
        %v728 = vadd.f32 %v726, %v727
        %729 = vadd.xlane.f32.xlu0 %v728
        %v730 = vpop.xlane.xlu0 %729
        %v731 = vrot.slane %v730, 4
        %v732 = vadd.f32 %v730, %v731
        %v733 = vrot.slane %v732, 2
        %v734 = vadd.f32 %v732, %v733
        %v735 = vrot.slane %v734, 1
        %v736 = vadd.f32 %v734, %v735
        %s737 = vtos %v736
        %v738 = vrcp.pop 320.0
        %s739 = vtos %v738
        %s740 = smul.f32 %s737, %s739
        %s741 = smul.f32 %s723, %s723
        %s742 = ssub.f32 %s740, %s741
        %v743 = vstv %s723
        %v744 = vsub.f32 %v707, %v743
        %v745 = vsub.f32 %v708, %v743
        %s746 = sadd.f32 %s742, 1e-05
        %v747 = vstv %s746
        %v748 = vrsqrt.pop %v747
        %s749 = vtos %v748
        %v750 = vstv %s749
        %v751 = vmul.f32 %v744, %v750
        %v752 = vmul.f32 %v745, %v750
        %v753 = vld [vmem:[%s5] sm:$0xff]
        %v754 = vld [vmem:[%s5 + $0x8] sm:$0x3]
        %v755 = vmul.f32 %v751, %v753
        %v756 = vmul.f32 %v752, %v754
        %v757 = vld [vmem:[%s6] sm:$0xff]
        %v758 = vld [vmem:[%s6 + $0x8] sm:$0x3]
        %v759 = vadd.f32 %v755, %v757
        %v760 = vadd.f32 %v756, %v758
        %v761 = vmax.f32 %v759, 0.0
        %v762 = vmax.f32 %v760, 0.0
        %763 = vst.msk [vmem:[%s394] sm:$0xff] %vm457, %v761
        %764 = vst.msk [vmem:[%s394 + $0x8] sm:$0x3] %vm459, %v762
        %p765 = scmp.lt.s32.totalorder %s22, 1
        %s766 = scalar_select %p765, %s22, 1
        %s767 = smul.addr %s766, 2
        %s768 = smul.addr %s767, 8
        %s769 = scalar_lea.vmem %s7, %s768
        %s770 = sand.u32 %s208, 1
        %s771 = sand.u32 %s208, 1
        %s772 = smul.addr %s771, 32
        %s773 = scalar_lea.vmem [#allocation7], %s772
        // Predicated region
        $region95: #{tpu_custom_call.1} parent=81 // pred_check
          %p774 = pneg %p192
        $region96: #{tpu_custom_call.1} parent=81 // pred_check_branch
          %776 = sbr.rel (%p774) target = $region98
        $region97: #{tpu_custom_call.1} parent=81 // pred_region
          _
        $region98: #{tpu_custom_call.1} parent=81 // pred_fallthru
          _
        // Predicated region
        $region99: #{tpu_custom_call.1} parent=81 // pred_check
          %p777 = pneg %p218
        $region100: #{tpu_custom_call.1} parent=81 // pred_check_branch
          %779 = sbr.rel (%p777) target = $region102
        $region101: #{tpu_custom_call.1} parent=81 // pred_region
          %s780 = smul.addr %s22, 2
          %s781 = smul.addr %s780, 8
          %s782 = scalar_lea.vmem %s8, %s781
          // Predicated region
          $region103: #{tpu_custom_call.1} parent=101 // pred_check
            _
          $region104: #{tpu_custom_call.1} parent=101 // pred_check_branch
            %784 = sbr.rel (0) target = $region106
          $region105: #{tpu_custom_call.1} parent=101 // pred_region
            // Predicated region
            $region107: #{tpu_custom_call.1} parent=105 // pred_check
              _
            $region108: #{tpu_custom_call.1} parent=105 // pred_check_branch
              %786 = sbr.rel (0) target = $region110
            $region109: #{tpu_custom_call.1} parent=105 // pred_region
              // Predicated region
              $region122: #{tpu_custom_call.1} parent=109 // pred_check
                _
              $region123: #{tpu_custom_call.1} parent=109 // pred_check_branch
                %807 = sbr.rel (0) target = $region125
              $region124: #{tpu_custom_call.1} parent=109 // pred_region
                loop: start=0, step=1, limit=1
                $region126: #{tpu_custom_call.1} parent=124 // loop_pre_header
                  _
                $region127: #{tpu_custom_call.1} parent=124 // loop_header
                  %s809 = sphi 0, %s813
                  %p810 = scmp.ge.s32.totalorder %s809, 1
                  %s814 = sphi %s773, %s773
                  %s815 = sphi %s782, %s782
                $region128: #{tpu_custom_call.1} parent=124 // loop_header_branch
                  %812 = sbr.rel (%p810) target = $region132
                $region129: #{tpu_custom_call.1} parent=124 // loop_body
                  %v816 = vld [vmem:[%s814] sm:$0xff]
                  %817 = vst [vmem:[%s815] sm:$0xff] %v816
                  %v818 = vld [vmem:[%s814 + $0x8] sm:$0xff]
                  %819 = vst [vmem:[%s815 + $0x8] sm:$0xff] %v818
                  %v820 = vld [vmem:[%s814 + $0x10] sm:$0xff]
                  %821 = vst [vmem:[%s815 + $0x20] sm:$0xff] %v820
                  %v822 = vld [vmem:[%s814 + $0x18] sm:$0xff]
                  %823 = vst [vmem:[%s815 + $0x28] sm:$0xff] %v822
                $region130: #{tpu_custom_call.1} parent=124 // loop_footer
                  %s813 = sadd.s32 1, %s809
                $region131: #{tpu_custom_call.1} parent=124 // loop_footer_branch
                  %808 = sbr.rel target = $region127
                $region132: #{tpu_custom_call.1} parent=124 // loop_exit
                  _
              $region125: #{tpu_custom_call.1} parent=109 // pred_fallthru
                _
              // Predicated region
              $region133: #{tpu_custom_call.1} parent=109 // pred_check
                _
              $region134: #{tpu_custom_call.1} parent=109 // pred_check_branch
                %825 = sbr.rel target = $region136
              $region135: #{tpu_custom_call.1} parent=109 // pred_region
                _
              $region136: #{tpu_custom_call.1} parent=109 // pred_fallthru
                _
            $region110: #{tpu_custom_call.1} parent=105 // pred_fallthru
              _
            // Predicated region
            $region111: #{tpu_custom_call.1} parent=105 // pred_check
              _
            $region112: #{tpu_custom_call.1} parent=105 // pred_check_branch
              %788 = sbr.rel target = $region114
            $region113: #{tpu_custom_call.1} parent=105 // pred_region
              loop: start=0, step=1, limit=1
              $region115: #{tpu_custom_call.1} parent=113 // loop_pre_header
                _
              $region116: #{tpu_custom_call.1} parent=113 // loop_header
                %s791 = sphi 0, %s795
                %p792 = scmp.ge.s32.totalorder %s791, 1
                %s796 = sphi %s773, %s773
                %s797 = sphi %s782, %s782
              $region117: #{tpu_custom_call.1} parent=113 // loop_header_branch
                %794 = sbr.rel (%p792) target = $region121
              $region118: #{tpu_custom_call.1} parent=113 // loop_body
                %v798 = vld [vmem:[%s796] sm:$0xff]
                %799 = vst [vmem:[%s797] sm:$0xff] %v798
                %v800 = vld [vmem:[%s796 + $0x8] sm:$0xff]
                %801 = vst [vmem:[%s797 + $0x8] sm:$0xff] %v800
                %v802 = vld [vmem:[%s796 + $0x10] sm:$0xff]
                %803 = vst [vmem:[%s797 + $0x20] sm:$0xff] %v802
                %v804 = vld [vmem:[%s796 + $0x18] sm:$0xff]
                %805 = vst [vmem:[%s797 + $0x28] sm:$0xff] %v804
              $region119: #{tpu_custom_call.1} parent=113 // loop_footer
                %s795 = sadd.s32 1, %s791
              $region120: #{tpu_custom_call.1} parent=113 // loop_footer_branch
                %790 = sbr.rel target = $region116
              $region121: #{tpu_custom_call.1} parent=113 // loop_exit
                _
            $region114: #{tpu_custom_call.1} parent=105 // pred_fallthru
              _
          $region106: #{tpu_custom_call.1} parent=101 // pred_fallthru
            _
          %826 = vnop
        $region102: #{tpu_custom_call.1} parent=81 // pred_fallthru
          _
      $region82: #{tpu_custom_call.1} parent=5 // pred_fallthru
        _
      %p827 = scmp.le.s32.totalorder 2, %s17
      // Predicated region
      $region137: #{tpu_custom_call.1} parent=5 // pred_check
        %p828 = pneg %p827
      $region138: #{tpu_custom_call.1} parent=5 // pred_check_branch
        %830 = sbr.rel (%p828) target = $region140
      $region139: #{tpu_custom_call.1} parent=5 // pred_region
        %s831 = ssub.s32 %s17, 2
        // Predicated region
        $region141: #{tpu_custom_call.1} parent=139 // pred_check
          %p832 = pneg %p198
        $region142: #{tpu_custom_call.1} parent=139 // pred_check_branch
          %834 = sbr.rel (%p832) target = $region144
        $region143: #{tpu_custom_call.1} parent=139 // pred_region
          %p835 = scmp.lt.s32.totalorder %s23, 1
          %s836 = scalar_select %p835, %s23, 1
          %s837 = smul.addr %s836, 2
          %s838 = smul.addr %s837, 8
          %s839 = scalar_lea.vmem %s7, %s838
        $region144: #{tpu_custom_call.1} parent=139 // pred_fallthru
          _
        // Predicated region
        $region145: #{tpu_custom_call.1} parent=139 // pred_check
          %p840 = pneg %p224
        $region146: #{tpu_custom_call.1} parent=139 // pred_check_branch
          %842 = sbr.rel (%p840) target = $region148
        $region147: #{tpu_custom_call.1} parent=139 // pred_region
          %s843 = sand.u32 %s209, 1
          %s844 = sand.u32 %s209, 1
          %s845 = smul.addr %s844, 32
          %s846 = scalar_lea.vmem [#allocation7], %s845
        $region148: #{tpu_custom_call.1} parent=139 // pred_fallthru
          _
      $region140: #{tpu_custom_call.1} parent=5 // pred_fallthru
        _
    $region6: #{tpu_custom_call.1} parent=1 // loop_footer
      %s21 = sadd.s32 1, %s17
    $region7: #{tpu_custom_call.1} parent=1 // loop_footer_branch
      %16 = sbr.rel target = $region3
    $region8: #{tpu_custom_call.1} parent=1 // loop_exit
      _
    %847 = vsyncpa [#allocation3], 1
    %s848 = scalar_lea.sflag [#allocation3], 1
    %849 = vsyncpa %s848, 1
    %850 = vsyncpa [#allocation5], 1

</llo_original>
